<compile_context>
chip_gen: v5e
topology: v5e:2x2
jax: 0.10.0
libtpu: 0.0.40
codegen_flags: <defaults>
</compile_context>

<pallas_src>
import jax
import jax.numpy as jnp
from jax import lax
from jax.experimental import pallas as pl
from jax.experimental.pallas import tpu as pltpu

EPS = 1e-5  # nn.BatchNorm2d default eps


def _conv_stats_kernel(p_ref, w1_ref, y_ref, st_ref):
    # p_ref : (4, 9*Cin, tm) bf16  im2col patches, 4 pooling parities stacked
    # w1_ref: (Cout, 9*Cin)  bf16
    # y_ref : (4, Cout, tm)  bf16  pre-BN conv output (bias-free; bias cancels in BN)
    # st_ref: (1, Cout, 2)   f32   per-tile [sum, sum-of-squares] partials
    cout = w1_ref.shape[0]
    w1 = w1_ref[...]
    s_acc = jnp.zeros((cout, 1), jnp.float32)
    q_acc = jnp.zeros((cout, 1), jnp.float32)
    for p in range(4):  # unrolled: 4 MXU matmuls with lane-dense N=tm
        y = jnp.dot(w1, p_ref[p], preferred_element_type=jnp.float32)  # (Cout, tm) f32
        y_ref[p] = y.astype(y_ref.dtype)
        s_acc = s_acc + jnp.sum(y, axis=1, keepdims=True)   # cross-lane XLU reduce
        q_acc = q_acc + jnp.sum(y * y, axis=1, keepdims=True)
    st_ref[0, :, 0:1] = s_acc
    st_ref[0, :, 1:2] = q_acc


def _bn_pool_conv2_kernel(y_ref, sc_ref, sh_ref, w2_ref, b2_ref, o_ref):
    # y_ref : (4, Cout, tm) bf16; sc/sh: (Cout, 1) f32
    # w2_ref: (Clast, Cout) bf16; b2: (Clast, 1) f32
    # o_ref : (Clast, tm)   f32   lane-dense store, no relayout
    sc = sc_ref[...]
    sh = sh_ref[...]
    r0 = jnp.maximum(y_ref[0].astype(jnp.float32) * sc + sh, 0.0)
    r1 = jnp.maximum(y_ref[1].astype(jnp.float32) * sc + sh, 0.0)
    r2 = jnp.maximum(y_ref[2].astype(jnp.float32) * sc + sh, 0.0)
    r3 = jnp.maximum(y_ref[3].astype(jnp.float32) * sc + sh, 0.0)
    pooled = jnp.maximum(jnp.maximum(r0, r1), jnp.maximum(r2, r3))   # 2x2/2 max-pool
    out = jnp.dot(w2_ref[...], pooled.astype(w2_ref.dtype),
                  preferred_element_type=jnp.float32)                 # 1x1 conv
    o_ref[...] = jnp.maximum(out + b2_ref[...], 0.0).astype(o_ref.dtype)


def _ceil_to(a, b):
    return -(-a // b) * b


def _plan_tiles(m, tm_max=4096):
    """Lane-tile the flattened pixel axis M.

    tm is a multiple of 128 (lane width) and Mp (padded M) a multiple of tm.
    tm_max=4096 keeps the double-buffered pass-1 footprint ~4 MiB (fits every
    generation's default scoped-VMEM limit); any lane-aligned M >= 256 gets
    >= 2 parallel tiles so v7x's two TensorCores both get work.
    """
    lane = 128
    mp = _ceil_to(max(m, 1), lane)
    n_tiles = 1 if mp <= lane else max(2, -(-mp // tm_max))
    tm = _ceil_to(-(-mp // n_tiles), lane)
    mp = n_tiles * tm
    return mp, tm, n_tiles


def stm_renet_block_d(x_nchw, params):
    """Forward pass of STM_RENet_BlockD.  x_nchw: (N, Cin, H, W) float32."""
    w1_oihw, _b1_unused, gamma, beta, w2_oihw, b2 = params
    # _b1_unused: conv1 bias is mathematically cancelled by training-mode BN.
    N, Cin, H, W = x_nchw.shape
    Cout = w1_oihw.shape[0]
    Clast = w2_oihw.shape[0]
    assert H % 2 == 0 and W % 2 == 0
    Hh, Wh = H // 2, W // 2
    M = N * Hh * Wh
    K9 = 9 * Cin
    Mp, tm, n_tiles = _plan_tiles(M)

    # ---- wrapper glue: spatial pad, parity split, 9-tap im2col (channel-major) ----
    x = x_nchw.astype(jnp.float32)
    xp = jnp.pad(x, ((0, 0), (0, 0), (2, 2), (2, 2)))
    pats = []
    for dh in range(2):
        for dw in range(2):
            sub = xp[:, :, dh::2, dw::2]                      # (N, Cin, Hh+2, Wh+2)
            taps = [sub[:, :, kh:kh + Hh, kw:kw + Wh]         # (N, Cin, Hh, Wh)
                    for kh in range(3) for kw in range(3)]
            t = jnp.stack(taps, axis=0)                       # (9, N, Cin, Hh, Wh)
            pats.append(jnp.transpose(t, (0, 2, 1, 3, 4)).reshape(K9, M))
    patches = jnp.stack(pats, axis=0)                         # (4, K9, M) pixels-on-lanes
    patches = jnp.pad(patches, ((0, 0), (0, 0), (0, Mp - M))).astype(jnp.bfloat16)

    w1 = jnp.transpose(w1_oihw, (0, 2, 3, 1)).reshape(Cout, K9).astype(jnp.bfloat16)
    w2 = w2_oihw[:, :, 0, 0].astype(jnp.bfloat16)             # (Clast, Cout)

    cparams = pltpu.CompilerParams(dimension_semantics=("parallel",))

    # ---- pass 1: dilated conv (4 parity matmuls per tile) + partial BN stats ----
    y, partials = pl.pallas_call(
        _conv_stats_kernel,
        out_shape=(jax.ShapeDtypeStruct((4, Cout, Mp), jnp.bfloat16),
                   jax.ShapeDtypeStruct((n_tiles, Cout, 2), jnp.float32)),
        grid=(n_tiles,),
        in_specs=[pl.BlockSpec((4, K9, tm), lambda i: (0, 0, i)),
                  pl.BlockSpec((Cout, K9), lambda i: (0, 0))],
        out_specs=(pl.BlockSpec((4, Cout, tm), lambda i: (0, 0, i)),
                   pl.BlockSpec((1, Cout, 2), lambda i: (i, 0, 0))),
        compiler_params=cparams,
        cost_estimate=pl.CostEstimate(
            flops=2 * 4 * Mp * K9 * Cout + 3 * 4 * Mp * Cout,
            transcendentals=0,
            bytes_accessed=2 * (4 * Mp * K9 + 4 * Mp * Cout + K9 * Cout)
                           + 4 * n_tiles * 2 * Cout),
    )(patches, w1)

    # ---- finish BN stats (tiny per-channel math, stays in XLA, all f32) ----
    ssum = jnp.sum(partials[:, :, 0], axis=0)                  # (Cout,)
    sqsum = jnp.sum(partials[:, :, 1], axis=0)
    cnt = jnp.float32(4 * M)                                   # true count (pad cols are 0)
    mean = ssum / cnt
    var = jnp.maximum(sqsum / cnt - mean * mean, 0.0)          # biased batch variance
    scale = gamma.astype(jnp.float32) * lax.rsqrt(var + EPS)
    shift = beta.astype(jnp.float32) - mean * scale
    scale = scale.reshape(Cout, 1)
    shift = shift.reshape(Cout, 1)

    # ---- pass 2: BN affine + ReLU + 2x2 pool + 1x1 conv + ReLU (lane-dense) ----
    out2d = pl.pallas_call(
        _bn_pool_conv2_kernel,
        out_shape=jax.ShapeDtypeStruct((Clast, Mp), jnp.float32),
        grid=(n_tiles,),
        in_specs=[pl.BlockSpec((4, Cout, tm), lambda i: (0, 0, i)),
                  pl.BlockSpec((Cout, 1), lambda i: (0, 0)),
                  pl.BlockSpec((Cout, 1), lambda i: (0, 0)),
                  pl.BlockSpec((Clast, Cout), lambda i: (0, 0)),
                  pl.BlockSpec((Clast, 1), lambda i: (0, 0))],
        out_specs=pl.BlockSpec((Clast, tm), lambda i: (0, i)),
        compiler_params=cparams,
        cost_estimate=pl.CostEstimate(
            flops=2 * Mp * Cout * Clast + 8 * Mp * Cout + 2 * Mp * Clast,
            transcendentals=0,
            bytes_accessed=2 * (4 * Mp * Cout + Cout * Clast)
                           + 4 * (Clast * Mp + 2 * Cout + Clast)),
    )(y, scale, shift, w2, b2.astype(jnp.float32).reshape(Clast, 1))

    out = out2d[:, :M].reshape(Clast, N, Hh, Wh)
    return jnp.transpose(out, (1, 0, 2, 3))                    # cheap permute -> NCHW


def _reference(x, w1, b1, gamma, beta, w2, b2):
    """Pure-JAX f32 reference of the PyTorch forward (training-mode BN)."""
    y = lax.conv_general_dilated(x, w1, window_strides=(1, 1),
                                 padding=((2, 2), (2, 2)), rhs_dilation=(2, 2),
                                 dimension_numbers=('NCHW', 'OIHW', 'NCHW'))
    y = y + b1[None, :, None, None]
    mean = jnp.mean(y, axis=(0, 2, 3), keepdims=True)
    var = jnp.mean((y - mean) ** 2, axis=(0, 2, 3), keepdims=True)
    y = (y - mean) * lax.rsqrt(var + EPS)
    y = y * gamma[None, :, None, None] + beta[None, :, None, None]
    y = jnp.maximum(y, 0.0)
    y = lax.reduce_window(y, -jnp.inf, lax.max, (1, 1, 2, 2), (1, 1, 2, 2), 'VALID')
    y = lax.conv_general_dilated(y, w2, (1, 1), 'VALID',
                                 dimension_numbers=('NCHW', 'OIHW', 'NCHW'))
    y = y + b2[None, :, None, None]
    return jnp.maximum(y, 0.0)


if __name__ == "__main__":
    key = jax.random.PRNGKey(0)
    ks = jax.random.split(key, 7)
    N, Cin, H, W = 2, 4, 16, 16
    Cout, Clast = 8, 16

    x = jax.random.normal(ks[0], (N, Cin, H, W), jnp.float32)
    w1 = 0.2 * jax.random.normal(ks[1], (Cout, Cin, 3, 3), jnp.float32)
    b1 = 0.1 * jax.random.normal(ks[2], (Cout,), jnp.float32)
    gamma = 1.0 + 0.1 * jax.random.normal(ks[3], (Cout,), jnp.float32)
    beta = 0.1 * jax.random.normal(ks[4], (Cout,), jnp.float32)
    w2 = 0.2 * jax.random.normal(ks[5], (Clast, Cout, 1, 1), jnp.float32)
    b2 = 0.1 * jax.random.normal(ks[6], (Clast,), jnp.float32)

    params = (w1, b1, gamma, beta, w2, b2)
    out = jax.block_until_ready(jax.jit(stm_renet_block_d)(x, params))

    ref = _reference(x, w1, b1, gamma, beta, w2, b2)
    assert out.shape == (N, Clast, H // 2, W // 2), out.shape
    # bf16 MXU operands (f32 accumulate / f32 stats): expected max abs error ~1e-2.
    err = float(jnp.max(jnp.abs(out - ref)))
    assert bool(jnp.allclose(out, ref, atol=3e-2, rtol=3e-2)), err
    print("KERNEL_OK")
</pallas_src>

<mosaic_0001>
module attributes {stable_mosaic.version = 11 : i64} {
  func.func @_conv_stats_kernel(%arg0: i32, %arg1: memref<4x36x128xbf16, #tpu.memory_space<vmem>>, %arg2: memref<8x36xbf16, #tpu.memory_space<vmem>>, %arg3: memref<4x8x128xbf16, #tpu.memory_space<vmem>>, %arg4: memref<1x8x2xf32, #tpu.memory_space<vmem>>) attributes {dimension_semantics = [#tpu.dimension_semantics<parallel>], iteration_bounds = array<i64: 1>, scalar_prefetch = 0 : i64, scratch_operands = 0 : i64, tpu.core_type = #tpu.core_type<tc>, window_params = [{transform_indices = @transform_0, window_bounds = array<i64: 4, 36, 128>}, {pipeline_mode = #tpu.pipeline_mode<synchronous>, transform_indices = @transform_1, window_bounds = array<i64: 8, 36>}, {transform_indices = @transform_2, window_bounds = array<i64: 4, 8, 128>}, {transform_indices = @transform_3, window_bounds = array<i64: 1, 8, 2>}]} {
    %c0 = arith.constant 0 : index
    %c0_0 = arith.constant 0 : index
    %0 = vector.load %arg2[%c0, %c0_0] : memref<8x36xbf16, #tpu.memory_space<vmem>>, vector<8x36xbf16>
    %cst = arith.constant 0.000000e+00 : f32
    %1 = vector.broadcast %cst : f32 to vector<8x1xf32>
    %cst_1 = arith.constant 0.000000e+00 : f32
    %2 = vector.broadcast %cst_1 : f32 to vector<8x1xf32>
    %c0_2 = arith.constant 0 : index
    %c0_3 = arith.constant 0 : index
    %c0_4 = arith.constant 0 : index
    %3 = vector.load %arg1[%c0_2, %c0_3, %c0_4] : memref<4x36x128xbf16, #tpu.memory_space<vmem>>, vector<1x36x128xbf16>
    %4 = vector.shape_cast %3 : vector<1x36x128xbf16> to vector<36x128xbf16>
    %cst_5 = arith.constant dense<0.000000e+00> : vector<8x128xf32>
    %5 = tpu.matmul %0, %4, %cst_5 {dimension_numbers = #tpu.dot_dimension_numbers<[1], [0], [0], [1], [0, 0, 1, 1], [], []>} : vector<8x36xbf16>, vector<36x128xbf16>, vector<8x128xf32> -> vector<8x128xf32>
    %6 = arith.truncf %5 : vector<8x128xf32> to vector<8x128xbf16>
    %c0_6 = arith.constant 0 : index
    %c0_7 = arith.constant 0 : index
    %c0_8 = arith.constant 0 : index
    %7 = vector.load %arg3[%c0_6, %c0_7, %c0_8] : memref<4x8x128xbf16, #tpu.memory_space<vmem>>, vector<1x8x128xbf16>
    %8 = vector.shape_cast %7 : vector<1x8x128xbf16> to vector<8x128xbf16>
    %9 = vector.shape_cast %6 : vector<8x128xbf16> to vector<1x8x128xbf16>
    tpu.vector_store %arg3[%c0_6, %c0_7, %c0_8], %9 {strides = array<i32>} : memref<4x8x128xbf16, #tpu.memory_space<vmem>>, vector<1x8x128xbf16>,
    %cst_9 = arith.constant dense<0.000000e+00> : vector<8xf32>
    %10 = vector.multi_reduction <add>, %5, %cst_9 [1] : vector<8x128xf32> to vector<8xf32>
    %11 = vector.shape_cast %10 : vector<8xf32> to vector<8x1xf32>
    %12 = arith.addf %1, %11 : vector<8x1xf32>
    %13 = arith.mulf %5, %5 : vector<8x128xf32>
    %cst_10 = arith.constant dense<0.000000e+00> : vector<8xf32>
    %14 = vector.multi_reduction <add>, %13, %cst_10 [1] : vector<8x128xf32> to vector<8xf32>
    %15 = vector.shape_cast %14 : vector<8xf32> to vector<8x1xf32>
    %16 = arith.addf %2, %15 : vector<8x1xf32>
    %c1 = arith.constant 1 : index
    %c0_11 = arith.constant 0 : index
    %c0_12 = arith.constant 0 : index
    %17 = vector.load %arg1[%c1, %c0_11, %c0_12] : memref<4x36x128xbf16, #tpu.memory_space<vmem>>, vector<1x36x128xbf16>
    %18 = vector.shape_cast %17 : vector<1x36x128xbf16> to vector<36x128xbf16>
    %cst_13 = arith.constant dense<0.000000e+00> : vector<8x128xf32>
    %19 = tpu.matmul %0, %18, %cst_13 {dimension_numbers = #tpu.dot_dimension_numbers<[1], [0], [0], [1], [0, 0, 1, 1], [], []>} : vector<8x36xbf16>, vector<36x128xbf16>, vector<8x128xf32> -> vector<8x128xf32>
    %20 = arith.truncf %19 : vector<8x128xf32> to vector<8x128xbf16>
    %c1_14 = arith.constant 1 : index
    %c0_15 = arith.constant 0 : index
    %c0_16 = arith.constant 0 : index
    %21 = vector.load %arg3[%c1_14, %c0_15, %c0_16] : memref<4x8x128xbf16, #tpu.memory_space<vmem>>, vector<1x8x128xbf16>
    %22 = vector.shape_cast %21 : vector<1x8x128xbf16> to vector<8x128xbf16>
    %23 = vector.shape_cast %20 : vector<8x128xbf16> to vector<1x8x128xbf16>
    tpu.vector_store %arg3[%c1_14, %c0_15, %c0_16], %23 {strides = array<i32>} : memref<4x8x128xbf16, #tpu.memory_space<vmem>>, vector<1x8x128xbf16>,
    %cst_17 = arith.constant dense<0.000000e+00> : vector<8xf32>
    %24 = vector.multi_reduction <add>, %19, %cst_17 [1] : vector<8x128xf32> to vector<8xf32>
    %25 = vector.shape_cast %24 : vector<8xf32> to vector<8x1xf32>
    %26 = arith.addf %12, %25 : vector<8x1xf32>
    %27 = arith.mulf %19, %19 : vector<8x128xf32>
    %cst_18 = arith.constant dense<0.000000e+00> : vector<8xf32>
    %28 = vector.multi_reduction <add>, %27, %cst_18 [1] : vector<8x128xf32> to vector<8xf32>
    %29 = vector.shape_cast %28 : vector<8xf32> to vector<8x1xf32>
    %30 = arith.addf %16, %29 : vector<8x1xf32>
    %c2 = arith.constant 2 : index
    %c0_19 = arith.constant 0 : index
    %c0_20 = arith.constant 0 : index
    %31 = vector.load %arg1[%c2, %c0_19, %c0_20] : memref<4x36x128xbf16, #tpu.memory_space<vmem>>, vector<1x36x128xbf16>
    %32 = vector.shape_cast %31 : vector<1x36x128xbf16> to vector<36x128xbf16>
    %cst_21 = arith.constant dense<0.000000e+00> : vector<8x128xf32>
    %33 = tpu.matmul %0, %32, %cst_21 {dimension_numbers = #tpu.dot_dimension_numbers<[1], [0], [0], [1], [0, 0, 1, 1], [], []>} : vector<8x36xbf16>, vector<36x128xbf16>, vector<8x128xf32> -> vector<8x128xf32>
    %34 = arith.truncf %33 : vector<8x128xf32> to vector<8x128xbf16>
    %c2_22 = arith.constant 2 : index
    %c0_23 = arith.constant 0 : index
    %c0_24 = arith.constant 0 : index
    %35 = vector.load %arg3[%c2_22, %c0_23, %c0_24] : memref<4x8x128xbf16, #tpu.memory_space<vmem>>, vector<1x8x128xbf16>
    %36 = vector.shape_cast %35 : vector<1x8x128xbf16> to vector<8x128xbf16>
    %37 = vector.shape_cast %34 : vector<8x128xbf16> to vector<1x8x128xbf16>
    tpu.vector_store %arg3[%c2_22, %c0_23, %c0_24], %37 {strides = array<i32>} : memref<4x8x128xbf16, #tpu.memory_space<vmem>>, vector<1x8x128xbf16>,
    %cst_25 = arith.constant dense<0.000000e+00> : vector<8xf32>
    %38 = vector.multi_reduction <add>, %33, %cst_25 [1] : vector<8x128xf32> to vector<8xf32>
    %39 = vector.shape_cast %38 : vector<8xf32> to vector<8x1xf32>
    %40 = arith.addf %26, %39 : vector<8x1xf32>
    %41 = arith.mulf %33, %33 : vector<8x128xf32>
    %cst_26 = arith.constant dense<0.000000e+00> : vector<8xf32>
    %42 = vector.multi_reduction <add>, %41, %cst_26 [1] : vector<8x128xf32> to vector<8xf32>
    %43 = vector.shape_cast %42 : vector<8xf32> to vector<8x1xf32>
    %44 = arith.addf %30, %43 : vector<8x1xf32>
    %c3 = arith.constant 3 : index
    %c0_27 = arith.constant 0 : index
    %c0_28 = arith.constant 0 : index
    %45 = vector.load %arg1[%c3, %c0_27, %c0_28] : memref<4x36x128xbf16, #tpu.memory_space<vmem>>, vector<1x36x128xbf16>
    %46 = vector.shape_cast %45 : vector<1x36x128xbf16> to vector<36x128xbf16>
    %cst_29 = arith.constant dense<0.000000e+00> : vector<8x128xf32>
    %47 = tpu.matmul %0, %46, %cst_29 {dimension_numbers = #tpu.dot_dimension_numbers<[1], [0], [0], [1], [0, 0, 1, 1], [], []>} : vector<8x36xbf16>, vector<36x128xbf16>, vector<8x128xf32> -> vector<8x128xf32>
    %48 = arith.truncf %47 : vector<8x128xf32> to vector<8x128xbf16>
    %c3_30 = arith.constant 3 : index
    %c0_31 = arith.constant 0 : index
    %c0_32 = arith.constant 0 : index
    %49 = vector.load %arg3[%c3_30, %c0_31, %c0_32] : memref<4x8x128xbf16, #tpu.memory_space<vmem>>, vector<1x8x128xbf16>
    %50 = vector.shape_cast %49 : vector<1x8x128xbf16> to vector<8x128xbf16>
    %51 = vector.shape_cast %48 : vector<8x128xbf16> to vector<1x8x128xbf16>
    tpu.vector_store %arg3[%c3_30, %c0_31, %c0_32], %51 {strides = array<i32>} : memref<4x8x128xbf16, #tpu.memory_space<vmem>>, vector<1x8x128xbf16>,
    %cst_33 = arith.constant dense<0.000000e+00> : vector<8xf32>
    %52 = vector.multi_reduction <add>, %47, %cst_33 [1] : vector<8x128xf32> to vector<8xf32>
    %53 = vector.shape_cast %52 : vector<8xf32> to vector<8x1xf32>
    %54 = arith.addf %40, %53 : vector<8x1xf32>
    %55 = arith.mulf %47, %47 : vector<8x128xf32>
    %cst_34 = arith.constant dense<0.000000e+00> : vector<8xf32>
    %56 = vector.multi_reduction <add>, %55, %cst_34 [1] : vector<8x128xf32> to vector<8xf32>
    %57 = vector.shape_cast %56 : vector<8xf32> to vector<8x1xf32>
    %58 = arith.addf %44, %57 : vector<8x1xf32>
    %c0_35 = arith.constant 0 : index
    %c0_36 = arith.constant 0 : index
    %c0_37 = arith.constant 0 : index
    %59 = vector.load %arg4[%c0_35, %c0_36, %c0_37] : memref<1x8x2xf32, #tpu.memory_space<vmem>>, vector<1x8x1xf32>
    %60 = vector.shape_cast %59 : vector<1x8x1xf32> to vector<8x1xf32>
    %61 = vector.shape_cast %54 : vector<8x1xf32> to vector<1x8x1xf32>
    tpu.vector_store %arg4[%c0_35, %c0_36, %c0_37], %61 {strides = array<i32>} : memref<1x8x2xf32, #tpu.memory_space<vmem>>, vector<1x8x1xf32>,
    %c0_38 = arith.constant 0 : index
    %c0_39 = arith.constant 0 : index
    %c1_40 = arith.constant 1 : index
    %62 = vector.load %arg4[%c0_38, %c0_39, %c1_40] : memref<1x8x2xf32, #tpu.memory_space<vmem>>, vector<1x8x1xf32>
    %63 = vector.shape_cast %62 : vector<1x8x1xf32> to vector<8x1xf32>
    %64 = vector.shape_cast %58 : vector<8x1xf32> to vector<1x8x1xf32>
    tpu.vector_store %arg4[%c0_38, %c0_39, %c1_40], %64 {strides = array<i32>} : memref<1x8x2xf32, #tpu.memory_space<vmem>>, vector<1x8x1xf32>,
    return
  }
  func.func @transform_0(%arg0: i32) -> (i32, i32, i32) {
    %c0_i32 = arith.constant 0 : i32
    %c0_i32_0 = arith.constant 0 : i32
    %c0_i32_1 = arith.constant 0 : i32
    return %c0_i32, %c0_i32_0, %arg0 : i32, i32, i32
  }
  func.func @transform_1(%arg0: i32) -> (i32, i32) {
    %c0_i32 = arith.constant 0 : i32
    %c0_i32_0 = arith.constant 0 : i32
    %c0_i32_1 = arith.constant 0 : i32
    return %c0_i32, %c0_i32_0 : i32, i32
  }
  func.func @transform_2(%arg0: i32) -> (i32, i32, i32) {
    %c0_i32 = arith.constant 0 : i32
    %c0_i32_0 = arith.constant 0 : i32
    %c0_i32_1 = arith.constant 0 : i32
    return %c0_i32, %c0_i32_0, %arg0 : i32, i32, i32
  }
  func.func @transform_3(%arg0: i32) -> (i32, i32, i32) {
    %c0_i32 = arith.constant 0 : i32
    %c0_i32_0 = arith.constant 0 : i32
    %c0_i32_1 = arith.constant 0 : i32
    return %arg0, %c0_i32, %c0_i32_0 : i32, i32, i32
  }
}

module attributes {stable_mosaic.version = 11 : i64} {
  func.func @_bn_pool_conv2_kernel(%arg0: i32, %arg1: memref<4x8x128xbf16, #tpu.memory_space<vmem>>, %arg2: memref<8x1xf32, #tpu.memory_space<vmem>>, %arg3: memref<8x1xf32, #tpu.memory_space<vmem>>, %arg4: memref<16x8xbf16, #tpu.memory_space<vmem>>, %arg5: memref<16x1xf32, #tpu.memory_space<vmem>>, %arg6: memref<16x128xf32, #tpu.memory_space<vmem>>) attributes {dimension_semantics = [#tpu.dimension_semantics<parallel>], iteration_bounds = array<i64: 1>, scalar_prefetch = 0 : i64, scratch_operands = 0 : i64, tpu.core_type = #tpu.core_type<tc>, window_params = [{transform_indices = @transform_0, window_bounds = array<i64: 4, 8, 128>}, {pipeline_mode = #tpu.pipeline_mode<synchronous>, transform_indices = @transform_1, window_bounds = array<i64: 8, 1>}, {pipeline_mode = #tpu.pipeline_mode<synchronous>, transform_indices = @transform_2, window_bounds = array<i64: 8, 1>}, {pipeline_mode = #tpu.pipeline_mode<synchronous>, transform_indices = @transform_3, window_bounds = array<i64: 16, 8>}, {pipeline_mode = #tpu.pipeline_mode<synchronous>, transform_indices = @transform_4, window_bounds = array<i64: 16, 1>}, {transform_indices = @transform_5, window_bounds = array<i64: 16, 128>}]} {
    %c0 = arith.constant 0 : index
    %c0_0 = arith.constant 0 : index
    %0 = vector.load %arg2[%c0, %c0_0] : memref<8x1xf32, #tpu.memory_space<vmem>>, vector<8x1xf32>
    %c0_1 = arith.constant 0 : index
    %c0_2 = arith.constant 0 : index
    %1 = vector.load %arg3[%c0_1, %c0_2] : memref<8x1xf32, #tpu.memory_space<vmem>>, vector<8x1xf32>
    %c0_3 = arith.constant 0 : index
    %c0_4 = arith.constant 0 : index
    %c0_5 = arith.constant 0 : index
    %2 = vector.load %arg1[%c0_3, %c0_4, %c0_5] : memref<4x8x128xbf16, #tpu.memory_space<vmem>>, vector<1x8x128xbf16>
    %3 = vector.shape_cast %2 : vector<1x8x128xbf16> to vector<8x128xbf16>
    %4 = arith.extf %3 : vector<8x128xbf16> to vector<8x128xf32>
    %5 = vector.broadcast %0 : vector<8x1xf32> to vector<8x128xf32>
    %6 = arith.mulf %4, %5 : vector<8x128xf32>
    %7 = vector.broadcast %1 : vector<8x1xf32> to vector<8x128xf32>
    %8 = arith.addf %6, %7 : vector<8x128xf32>
    %cst = arith.constant 0.000000e+00 : f32
    %9 = vector.broadcast %cst : f32 to vector<8x128xf32>
    %10 = arith.maximumf %8, %9 : vector<8x128xf32>
    %c1 = arith.constant 1 : index
    %c0_6 = arith.constant 0 : index
    %c0_7 = arith.constant 0 : index
    %11 = vector.load %arg1[%c1, %c0_6, %c0_7] : memref<4x8x128xbf16, #tpu.memory_space<vmem>>, vector<1x8x128xbf16>
    %12 = vector.shape_cast %11 : vector<1x8x128xbf16> to vector<8x128xbf16>
    %13 = arith.extf %12 : vector<8x128xbf16> to vector<8x128xf32>
    %14 = vector.broadcast %0 : vector<8x1xf32> to vector<8x128xf32>
    %15 = arith.mulf %13, %14 : vector<8x128xf32>
    %16 = vector.broadcast %1 : vector<8x1xf32> to vector<8x128xf32>
    %17 = arith.addf %15, %16 : vector<8x128xf32>
    %cst_8 = arith.constant 0.000000e+00 : f32
    %18 = vector.broadcast %cst_8 : f32 to vector<8x128xf32>
    %19 = arith.maximumf %17, %18 : vector<8x128xf32>
    %c2 = arith.constant 2 : index
    %c0_9 = arith.constant 0 : index
    %c0_10 = arith.constant 0 : index
    %20 = vector.load %arg1[%c2, %c0_9, %c0_10] : memref<4x8x128xbf16, #tpu.memory_space<vmem>>, vector<1x8x128xbf16>
    %21 = vector.shape_cast %20 : vector<1x8x128xbf16> to vector<8x128xbf16>
    %22 = arith.extf %21 : vector<8x128xbf16> to vector<8x128xf32>
    %23 = vector.broadcast %0 : vector<8x1xf32> to vector<8x128xf32>
    %24 = arith.mulf %22, %23 : vector<8x128xf32>
    %25 = vector.broadcast %1 : vector<8x1xf32> to vector<8x128xf32>
    %26 = arith.addf %24, %25 : vector<8x128xf32>
    %cst_11 = arith.constant 0.000000e+00 : f32
    %27 = vector.broadcast %cst_11 : f32 to vector<8x128xf32>
    %28 = arith.maximumf %26, %27 : vector<8x128xf32>
    %c3 = arith.constant 3 : index
    %c0_12 = arith.constant 0 : index
    %c0_13 = arith.constant 0 : index
    %29 = vector.load %arg1[%c3, %c0_12, %c0_13] : memref<4x8x128xbf16, #tpu.memory_space<vmem>>, vector<1x8x128xbf16>
    %30 = vector.shape_cast %29 : vector<1x8x128xbf16> to vector<8x128xbf16>
    %31 = arith.extf %30 : vector<8x128xbf16> to vector<8x128xf32>
    %32 = vector.broadcast %0 : vector<8x1xf32> to vector<8x128xf32>
    %33 = arith.mulf %31, %32 : vector<8x128xf32>
    %34 = vector.broadcast %1 : vector<8x1xf32> to vector<8x128xf32>
    %35 = arith.addf %33, %34 : vector<8x128xf32>
    %cst_14 = arith.constant 0.000000e+00 : f32
    %36 = vector.broadcast %cst_14 : f32 to vector<8x128xf32>
    %37 = arith.maximumf %35, %36 : vector<8x128xf32>
    %38 = arith.maximumf %10, %19 : vector<8x128xf32>
    %39 = arith.maximumf %28, %37 : vector<8x128xf32>
    %40 = arith.maximumf %38, %39 : vector<8x128xf32>
    %c0_15 = arith.constant 0 : index
    %c0_16 = arith.constant 0 : index
    %41 = vector.load %arg4[%c0_15, %c0_16] : memref<16x8xbf16, #tpu.memory_space<vmem>>, vector<16x8xbf16>
    %42 = arith.truncf %40 : vector<8x128xf32> to vector<8x128xbf16>
    %cst_17 = arith.constant dense<0.000000e+00> : vector<16x128xf32>
    %43 = tpu.matmul %41, %42, %cst_17 {dimension_numbers = #tpu.dot_dimension_numbers<[1], [0], [0], [1], [0, 0, 1, 1], [], []>} : vector<16x8xbf16>, vector<8x128xbf16>, vector<16x128xf32> -> vector<16x128xf32>
    %c0_18 = arith.constant 0 : index
    %c0_19 = arith.constant 0 : index
    %44 = vector.load %arg5[%c0_18, %c0_19] : memref<16x1xf32, #tpu.memory_space<vmem>>, vector<16x1xf32>
    %45 = vector.broadcast %44 : vector<16x1xf32> to vector<16x128xf32>
    %46 = arith.addf %43, %45 : vector<16x128xf32>
    %cst_20 = arith.constant 0.000000e+00 : f32
    %47 = vector.broadcast %cst_20 : f32 to vector<16x128xf32>
    %48 = arith.maximumf %46, %47 : vector<16x128xf32>
    %c0_21 = arith.constant 0 : index
    %c0_22 = arith.constant 0 : index
    %49 = vector.load %arg6[%c0_21, %c0_22] : memref<16x128xf32, #tpu.memory_space<vmem>>, vector<16x128xf32>
    tpu.vector_store %arg6[%c0_21, %c0_22], %48 {strides = array<i32>} : memref<16x128xf32, #tpu.memory_space<vmem>>, vector<16x128xf32>,
    return
  }
  func.func @transform_0(%arg0: i32) -> (i32, i32, i32) {
    %c0_i32 = arith.constant 0 : i32
    %c0_i32_0 = arith.constant 0 : i32
    %c0_i32_1 = arith.constant 0 : i32
    return %c0_i32, %c0_i32_0, %arg0 : i32, i32, i32
  }
  func.func @transform_1(%arg0: i32) -> (i32, i32) {
    %c0_i32 = arith.constant 0 : i32
    %c0_i32_0 = arith.constant 0 : i32
    %c0_i32_1 = arith.constant 0 : i32
    return %c0_i32, %c0_i32_0 : i32, i32
  }
  func.func @transform_2(%arg0: i32) -> (i32, i32) {
    %c0_i32 = arith.constant 0 : i32
    %c0_i32_0 = arith.constant 0 : i32
    %c0_i32_1 = arith.constant 0 : i32
    return %c0_i32, %c0_i32_0 : i32, i32
  }
  func.func @transform_3(%arg0: i32) -> (i32, i32) {
    %c0_i32 = arith.constant 0 : i32
    %c0_i32_0 = arith.constant 0 : i32
    %c0_i32_1 = arith.constant 0 : i32
    return %c0_i32, %c0_i32_0 : i32, i32
  }
  func.func @transform_4(%arg0: i32) -> (i32, i32) {
    %c0_i32 = arith.constant 0 : i32
    %c0_i32_0 = arith.constant 0 : i32
    %c0_i32_1 = arith.constant 0 : i32
    return %c0_i32, %c0_i32_0 : i32, i32
  }
  func.func @transform_5(%arg0: i32) -> (i32, i32) {
    %c0_i32 = arith.constant 0 : i32
    %c0_i32_0 = arith.constant 0 : i32
    return %c0_i32, %arg0 : i32, i32
  }
}

</mosaic_0001>

<llo_original>
// kernel: stm_renet_block_d.3
$region0: #{stm_renet_block_d.3}
  #allocation0 [shape = 'u32[]', space=smem, size = 0x4, offset = 0x4, fixed_abs, tag = 'smem constant byte address 0x4 - core index']
  #allocation1 [shape = 'u32[72,128]{1,0:T(1,128)}', space=vmem, size = 0x9000, scoped, tag = 'internal scratch']
  %s0 = inlined_call_operand.vmem [shape: bf16[4,8,128], index: 0, kind: input, shape index: {}]
  %s1 = inlined_call_operand.vmem [shape: f32[8,1], index: 1, kind: input, shape index: {}]
  %s2 = inlined_call_operand.vmem [shape: f32[8,1], index: 2, kind: input, shape index: {}]
  %s3 = inlined_call_operand.vmem [shape: bf16[16,8], index: 3, kind: input, shape index: {}]
  %s4 = inlined_call_operand.vmem [shape: f32[16,1], index: 4, kind: input, shape index: {}]
  %s5 = inlined_call_operand.vmem [shape: f32[16,128], index: 5, kind: output, shape index: {}]
  %s6 = sld [smem:[#allocation0]]
  $region30: #{stm_renet_block_d.3} parent=0
    _
  %s8 = ssub.s32 1, %s6
  %s9 = scalar_select 0, %s8, %s6
  // Predicated region
  $region2: #{stm_renet_block_d.3} parent=0 // pred_check
    _
  $region3: #{stm_renet_block_d.3} parent=0 // pred_check_branch
    %11 = sbr.rel (0) target = $region5
  $region4: #{stm_renet_block_d.3} parent=0 // pred_region
    _
  $region5: #{stm_renet_block_d.3} parent=0 // pred_fallthru
    _
  // Predicated region
  $region6: #{stm_renet_block_d.3} parent=0 // pred_check
    _
  $region7: #{stm_renet_block_d.3} parent=0 // pred_check_branch
    %13 = sbr.rel (0) target = $region9
  $region8: #{stm_renet_block_d.3} parent=0 // pred_region
    _
  $region9: #{stm_renet_block_d.3} parent=0 // pred_fallthru
    _
  // Predicated region
  $region10: #{stm_renet_block_d.3} parent=0 // pred_check
    _
  $region11: #{stm_renet_block_d.3} parent=0 // pred_check_branch
    %15 = sbr.rel (0) target = $region13
  $region12: #{stm_renet_block_d.3} parent=0 // pred_region
    _
  $region13: #{stm_renet_block_d.3} parent=0 // pred_fallthru
    _
  // Predicated region
  $region14: #{stm_renet_block_d.3} parent=0 // pred_check
    _
  $region15: #{stm_renet_block_d.3} parent=0 // pred_check_branch
    %17 = sbr.rel (0) target = $region17
  $region16: #{stm_renet_block_d.3} parent=0 // pred_region
    _
  $region17: #{stm_renet_block_d.3} parent=0 // pred_fallthru
    _
  // Predicated region
  $region18: #{stm_renet_block_d.3} parent=0 // pred_check
    _
  $region19: #{stm_renet_block_d.3} parent=0 // pred_check_branch
    %19 = sbr.rel (0) target = $region21
  $region20: #{stm_renet_block_d.3} parent=0 // pred_region
    _
  $region21: #{stm_renet_block_d.3} parent=0 // pred_fallthru
    _
  %v21 = vld [vmem:[%s1] sm:$0xff]
  %v22 = vld [vmem:[%s2] sm:$0xff]
  %v23 = vld [vmem:[%s0] sm:$0xf]
  %v24 = vunpack.c.l.bf16 %v23
  %26 = vset.pattern.permute.xlu0 0
  %27 = vperm.xlu0 %26, %v21
  %v28 = vpop.permute.xlu0 %27
  %v30 = vmul.f32 %v24, %v28
  %32 = vset.pattern.permute.xlu0 0
  %33 = vperm.xlu0 %32, %v22
  %v34 = vpop.permute.xlu0 %33
  %v36 = vadd.f32 %v30, %v34
  %v37 = vmax.f32 %v36, 0.0
  %s38 = scalar_lea.vmem %s0, 4
  %v39 = vld [vmem:[%s38] sm:$0xf]
  %v40 = vunpack.c.l.bf16 %v39
  %v41 = vmul.f32 %v40, %v28
  %v42 = vadd.f32 %v41, %v34
  %v43 = vmax.f32 %v42, 0.0
  %s44 = scalar_lea.vmem %s0, 8
  %v45 = vld [vmem:[%s44] sm:$0xf]
  %v46 = vunpack.c.l.bf16 %v45
  %v47 = vmul.f32 %v46, %v28
  %v48 = vadd.f32 %v47, %v34
  %v49 = vmax.f32 %v48, 0.0
  %s50 = scalar_lea.vmem %s0, 12
  %v51 = vld [vmem:[%s50] sm:$0xf]
  %v52 = vunpack.c.l.bf16 %v51
  %v53 = vmul.f32 %v52, %v28
  %v54 = vadd.f32 %v53, %v34
  %v55 = vmax.f32 %v54, 0.0
  %v56 = vmax.f32 %v37, %v43
  %v57 = vmax.f32 %v49, %v55
  %v58 = vmax.f32 %v56, %v57
  %v59 = vld [vmem:[%s3] sm:$0xf]
  %v60 = vld [vmem:[%s3 + $0x4] sm:$0xf]
  %v61 = vpack.c.bf16 %v58, %v58
  %v62 = vld [vmem:[%s4] sm:$0xff]
  %v63 = vld [vmem:[%s4 + $0x8] sm:$0xff]
  %65 = vset.pattern.permute.xlu0 0
  %66 = vperm.xlu0 %65, %v62
  %v67 = vpop.permute.xlu0 %66
  %70 = vset.pattern.permute.xlu0 0
  %71 = vperm.xlu0 %70, %v63
  %v72 = vpop.permute.xlu0 %71
  %v76 = vunpack.c.l.b16 %v59
  %v77 = vunpack.c.l.b16 %v60
  %v78 = vpack.c.b16 %v77, %v76
  %vm79 = vcmask 64512
  %v81 = vsel %vm79, %v78, 0
  %vm83 = vcmask 1043456
  %v85 = vsel %vm83, %v61, 0
  %87 = vmatpush.bf16.msra.mxu0 0
  %88 = vmatpush.bf16.msra.mxu0 0
  %89 = vmatpush.bf16.msra.mxu0 0
  %90 = vmatpush.bf16.msra.mxu0 0
  %91 = vmatpush.bf16.msra.mxu0 0
  %92 = vmatpush.bf16.msra.mxu0 0
  %93 = vmatpush.bf16.msra.mxu0 0
  %94 = vmatpush.bf16.msra.mxu0 %v85
  %95 = vmatmul.bf16.gmra.mxu0 %v81
  %v96 = vpop.f32.mrf.mxu0
  %v97 = vadd.f32 %v67, %v96
  %v98 = vpop.f32.mrf.mxu0
  %v99 = vadd.f32 %v72, %v98
  %100 = vdwg.mxu0
  %v101 = vmax.f32 %v97, 0.0
  %v102 = vmax.f32 %v99, 0.0
  %103 = vst [vmem:[%s5] sm:$0xff] %v101
  %104 = vst [vmem:[%s5 + $0x8] sm:$0xff] %v102
  // Predicated region
  $region22: #{stm_renet_block_d.3} parent=0 // pred_check
    _
  $region23: #{stm_renet_block_d.3} parent=0 // pred_check_branch
    %106 = sbr.rel (0) target = $region25
  $region24: #{stm_renet_block_d.3} parent=0 // pred_region
    _
  $region25: #{stm_renet_block_d.3} parent=0 // pred_fallthru
    _
  // Predicated region
  $region26: #{stm_renet_block_d.3} parent=0 // pred_check
    _
  $region27: #{stm_renet_block_d.3} parent=0 // pred_check_branch
    %108 = sbr.rel (0) target = $region29
  $region28: #{stm_renet_block_d.3} parent=0 // pred_region
    _
  $region29: #{stm_renet_block_d.3} parent=0 // pred_fallthru
    _

// kernel: stm_renet_block_d.2
$region0: #{stm_renet_block_d.2}
  #allocation0 [shape = 'u32[]', space=smem, size = 0x4, offset = 0x4, fixed_abs, tag = 'smem constant byte address 0x4 - core index']
  #allocation1 [shape = 'u32[72,128]{1,0:T(1,128)}', space=vmem, size = 0x9000, scoped, tag = 'internal scratch']
  %s0 = inlined_call_operand.vmem [shape: bf16[4,36,128], index: 0, kind: input, shape index: {}]
  %s1 = inlined_call_operand.vmem [shape: bf16[8,36], index: 1, kind: input, shape index: {}]
  %s2 = inlined_call_operand.vmem [shape: bf16[4,8,128], index: 2, kind: output, shape index: {0}]
  %s3 = inlined_call_operand.vmem [shape: f32[1,8,2], index: 3, kind: output, shape index: {1}]
  %4 = xla_tuple %s2, %s3
  %s5 = sld [smem:[#allocation0]]
  $region26: #{stm_renet_block_d.2} parent=0
    _
  %s7 = ssub.s32 1, %s5
  %s8 = scalar_select 0, %s7, %s5
  // Predicated region
  $region2: #{stm_renet_block_d.2} parent=0 // pred_check
    _
  $region3: #{stm_renet_block_d.2} parent=0 // pred_check_branch
    %10 = sbr.rel (0) target = $region5
  $region4: #{stm_renet_block_d.2} parent=0 // pred_region
    _
  $region5: #{stm_renet_block_d.2} parent=0 // pred_fallthru
    _
  // Predicated region
  $region6: #{stm_renet_block_d.2} parent=0 // pred_check
    _
  $region7: #{stm_renet_block_d.2} parent=0 // pred_check_branch
    %12 = sbr.rel (0) target = $region9
  $region8: #{stm_renet_block_d.2} parent=0 // pred_region
    _
  $region9: #{stm_renet_block_d.2} parent=0 // pred_fallthru
    _
  %v14 = vld [vmem:[%s1] sm:$0xf]
  %v15 = vld [vmem:[%s0] sm:$0xf]
  %v16 = vld [vmem:[%s0 + $0x4] sm:$0xf]
  %v17 = vld [vmem:[%s0 + $0x8] sm:$0xf]
  %v18 = vld [vmem:[%s0 + $0xc] sm:$0xf]
  %v19 = vld [vmem:[%s0 + $0x10] sm:$0x3]
  %v25 = vunpack.c.l.b16 %v15
  %v26 = vunpack.c.l.b16 %v16
  %v27 = vunpack.c.l.b16 %v17
  %v28 = vunpack.c.l.b16 %v18
  %v29 = vunpack.c.l.b16 %v19
  %v30 = vpack.c.b16 %v26, %v25
  %v31 = vpack.c.b16 %v28, %v27
  %v32 = vpack.c.b16 %v29, %v29
  %vm35 = vcmask 293888
  %v37 = vsel %vm35, %v14, 0
  %vm39 = vcmask 1041408
  %v41 = vsel %vm39, %v32, 0
  %43 = vmatpush.bf16.msra.mxu0 0
  %44 = vmatpush.bf16.msra.mxu0 0
  %45 = vmatpush.bf16.msra.mxu0 0
  %46 = vmatpush.bf16.msra.mxu0 0
  %47 = vmatpush.bf16.msra.mxu0 0
  %48 = vmatpush.bf16.msra.mxu0 %v41
  %49 = vmatpush.bf16.msra.mxu0 %v31
  %50 = vmatpush.bf16.msra.mxu0 %v30
  %51 = vmatmul.bf16.gmra.mxu0 %v37
  %v52 = vpop.f32.mrf.mxu0
  %v53 = vadd.f32 0.0, %v52
  %v54 = vpop.f32.mrf.mxu0
  %55 = vdwg.mxu0
  %v56 = vpack.c.bf16 %v53, %v53
  %57 = vst [vmem:[%s2] sm:$0xf] %v56
  %58 = vadd.xlane.f32.xlu0 %v53
  %v59 = vpop.xlane.xlu0 %58
  %v60 = vadd.f32 %v59, 0.0
  %v61 = vmul.f32 %v53, %v53
  %62 = vadd.xlane.f32.xlu0 %v61
  %v63 = vpop.xlane.xlu0 %62
  %v64 = vadd.f32 %v63, 0.0
  %s65 = scalar_lea.vmem %s0, 20
  %v66 = vld [vmem:[%s65] sm:$0xf]
  %v67 = vld [vmem:[%s65 + $0x4] sm:$0xf]
  %v68 = vld [vmem:[%s65 + $0x8] sm:$0xf]
  %v69 = vld [vmem:[%s65 + $0xc] sm:$0xf]
  %v70 = vld [vmem:[%s65 + $0x10] sm:$0x3]
  %v76 = vunpack.c.l.b16 %v66
  %v77 = vunpack.c.l.b16 %v67
  %v78 = vunpack.c.l.b16 %v68
  %v79 = vunpack.c.l.b16 %v69
  %v80 = vunpack.c.l.b16 %v70
  %v81 = vpack.c.b16 %v77, %v76
  %v82 = vpack.c.b16 %v79, %v78
  %v83 = vpack.c.b16 %v80, %v80
  %v87 = vsel %vm39, %v83, 0
  %89 = vmatpush.bf16.msra.mxu0 0
  %90 = vmatpush.bf16.msra.mxu0 0
  %91 = vmatpush.bf16.msra.mxu0 0
  %92 = vmatpush.bf16.msra.mxu0 0
  %93 = vmatpush.bf16.msra.mxu0 0
  %94 = vmatpush.bf16.msra.mxu0 %v87
  %95 = vmatpush.bf16.msra.mxu0 %v82
  %96 = vmatpush.bf16.msra.mxu0 %v81
  %97 = vmatmul.bf16.gmra.mxu0 %v37
  %v98 = vpop.f32.mrf.mxu0
  %v99 = vadd.f32 0.0, %v98
  %v100 = vpop.f32.mrf.mxu0
  %101 = vdwg.mxu0
  %v102 = vpack.c.bf16 %v99, %v99
  %s103 = scalar_lea.vmem %s2, 4
  %104 = vst [vmem:[%s103] sm:$0xf] %v102
  %105 = vadd.xlane.f32.xlu0 %v99
  %v106 = vpop.xlane.xlu0 %105
  %v107 = vadd.f32 %v60, %v106
  %v108 = vmul.f32 %v99, %v99
  %109 = vadd.xlane.f32.xlu0 %v108
  %v110 = vpop.xlane.xlu0 %109
  %v111 = vadd.f32 %v64, %v110
  %s112 = scalar_lea.vmem %s0, 40
  %v113 = vld [vmem:[%s112] sm:$0xf]
  %v114 = vld [vmem:[%s112 + $0x4] sm:$0xf]
  %v115 = vld [vmem:[%s112 + $0x8] sm:$0xf]
  %v116 = vld [vmem:[%s112 + $0xc] sm:$0xf]
  %v117 = vld [vmem:[%s112 + $0x10] sm:$0x3]
  %v123 = vunpack.c.l.b16 %v113
  %v124 = vunpack.c.l.b16 %v114
  %v125 = vunpack.c.l.b16 %v115
  %v126 = vunpack.c.l.b16 %v116
  %v127 = vunpack.c.l.b16 %v117
  %v128 = vpack.c.b16 %v124, %v123
  %v129 = vpack.c.b16 %v126, %v125
  %v130 = vpack.c.b16 %v127, %v127
  %v134 = vsel %vm39, %v130, 0
  %136 = vmatpush.bf16.msra.mxu0 0
  %137 = vmatpush.bf16.msra.mxu0 0
  %138 = vmatpush.bf16.msra.mxu0 0
  %139 = vmatpush.bf16.msra.mxu0 0
  %140 = vmatpush.bf16.msra.mxu0 0
  %141 = vmatpush.bf16.msra.mxu0 %v134
  %142 = vmatpush.bf16.msra.mxu0 %v129
  %143 = vmatpush.bf16.msra.mxu0 %v128
  %144 = vmatmul.bf16.gmra.mxu0 %v37
  %v145 = vpop.f32.mrf.mxu0
  %v146 = vadd.f32 0.0, %v145
  %v147 = vpop.f32.mrf.mxu0
  %148 = vdwg.mxu0
  %v149 = vpack.c.bf16 %v146, %v146
  %s150 = scalar_lea.vmem %s2, 8
  %151 = vst [vmem:[%s150] sm:$0xf] %v149
  %152 = vadd.xlane.f32.xlu0 %v146
  %v153 = vpop.xlane.xlu0 %152
  %v154 = vadd.f32 %v107, %v153
  %v155 = vmul.f32 %v146, %v146
  %156 = vadd.xlane.f32.xlu0 %v155
  %v157 = vpop.xlane.xlu0 %156
  %v158 = vadd.f32 %v111, %v157
  %s159 = scalar_lea.vmem %s0, 60
  %v160 = vld [vmem:[%s159] sm:$0xf]
  %v161 = vld [vmem:[%s159 + $0x4] sm:$0xf]
  %v162 = vld [vmem:[%s159 + $0x8] sm:$0xf]
  %v163 = vld [vmem:[%s159 + $0xc] sm:$0xf]
  %v164 = vld [vmem:[%s159 + $0x10] sm:$0x3]
  %v170 = vunpack.c.l.b16 %v160
  %v171 = vunpack.c.l.b16 %v161
  %v172 = vunpack.c.l.b16 %v162
  %v173 = vunpack.c.l.b16 %v163
  %v174 = vunpack.c.l.b16 %v164
  %v175 = vpack.c.b16 %v171, %v170
  %v176 = vpack.c.b16 %v173, %v172
  %v177 = vpack.c.b16 %v174, %v174
  %v181 = vsel %vm39, %v177, 0
  %183 = vmatpush.bf16.msra.mxu0 0
  %184 = vmatpush.bf16.msra.mxu0 0
  %185 = vmatpush.bf16.msra.mxu0 0
  %186 = vmatpush.bf16.msra.mxu0 0
  %187 = vmatpush.bf16.msra.mxu0 0
  %188 = vmatpush.bf16.msra.mxu0 %v181
  %189 = vmatpush.bf16.msra.mxu0 %v176
  %190 = vmatpush.bf16.msra.mxu0 %v175
  %191 = vmatmul.bf16.gmra.mxu0 %v37
  %v192 = vpop.f32.mrf.mxu0
  %v193 = vadd.f32 0.0, %v192
  %v194 = vpop.f32.mrf.mxu0
  %195 = vdwg.mxu0
  %v196 = vpack.c.bf16 %v193, %v193
  %s197 = scalar_lea.vmem %s2, 12
  %198 = vst [vmem:[%s197] sm:$0xf] %v196
  %199 = vadd.xlane.f32.xlu0 %v193
  %v200 = vpop.xlane.xlu0 %199
  %v201 = vadd.f32 %v154, %v200
  %v202 = vmul.f32 %v193, %v193
  %203 = vadd.xlane.f32.xlu0 %v202
  %v204 = vpop.xlane.xlu0 %203
  %v205 = vadd.f32 %v158, %v204
  %vm206 = vcmask 7168
  %207 = vst.msk [vmem:[%s3] sm:$0xff] %vm206, %v201
  %vm208 = vcmask 15368
  %209 = vst.msk [vmem:[%s3] sm:$0xff] %vm208, %v205
  // Predicated region
  $region10: #{stm_renet_block_d.2} parent=0 // pred_check
    _
  $region11: #{stm_renet_block_d.2} parent=0 // pred_check_branch
    %211 = sbr.rel (0) target = $region13
  $region12: #{stm_renet_block_d.2} parent=0 // pred_region
    _
  $region13: #{stm_renet_block_d.2} parent=0 // pred_fallthru
    _
  // Predicated region
  $region14: #{stm_renet_block_d.2} parent=0 // pred_check
    _
  $region15: #{stm_renet_block_d.2} parent=0 // pred_check_branch
    %213 = sbr.rel (0) target = $region17
  $region16: #{stm_renet_block_d.2} parent=0 // pred_region
    _
  $region17: #{stm_renet_block_d.2} parent=0 // pred_fallthru
    _
  // Predicated region
  $region18: #{stm_renet_block_d.2} parent=0 // pred_check
    _
  $region19: #{stm_renet_block_d.2} parent=0 // pred_check_branch
    %215 = sbr.rel (0) target = $region21
  $region20: #{stm_renet_block_d.2} parent=0 // pred_region
    _
  $region21: #{stm_renet_block_d.2} parent=0 // pred_fallthru
    _
  // Predicated region
  $region22: #{stm_renet_block_d.2} parent=0 // pred_check
    _
  $region23: #{stm_renet_block_d.2} parent=0 // pred_check_branch
    %217 = sbr.rel (0) target = $region25
  $region24: #{stm_renet_block_d.2} parent=0 // pred_region
    _
  $region25: #{stm_renet_block_d.2} parent=0 // pred_fallthru
    _

</llo_original>
